<compile_context>
chip_gen: v6e
topology: v6e:2x2x1
jax: 0.10.0
libtpu: 0.0.40
codegen_flags: <defaults>
</compile_context>

<pallas_src>
import jax
import jax.numpy as jnp
from jax.experimental import pallas as pl
from jax.experimental.pallas import tpu as pltpu


def _round_up(x: int, m: int) -> int:
    return (x + m - 1) // m * m


def _critic_kernel(state_ref, action_ref, w1s_ref, w1a_ref, b1_ref, w2_ref,
                   b2_ref, out_ref):
    # Layer 1 with fused concat: two MXU matmuls accumulate into the same f32 tile.
    h = jnp.dot(state_ref[...], w1s_ref[...], preferred_element_type=jnp.float32)
    h = h + jnp.dot(action_ref[...], w1a_ref[...], preferred_element_type=jnp.float32)
    h = jnp.maximum(h + b1_ref[...], 0.0)

    # Layer 2: N=1 output column -> VPU multiply + lane reduction (cheaper than MXU).
    q = jnp.sum(h * w2_ref[...], axis=-1, keepdims=True) + b2_ref[0]
    out_ref[...] = q.astype(out_ref.dtype)


def mlp_critic_forward(state, action, w1, b1, w2, b2, *, block_batch=512):
    """state: (B, S), action: (B, A); w1: (S+A, H), b1: (1, H); w2: (H, 1), b2: (1,)."""
    B, S = state.shape
    _, A = action.shape
    H = w1.shape[1]

    # Split W1 once so the batch-sized concat never hits HBM. Weight reshapes are tiny
    # one-time host-side ops, not per-step work.
    w1_s = jnp.asarray(w1[:S])          # (S, H)
    w1_a = jnp.asarray(w1[S:])          # (A, H)
    w2_row = w2.reshape(1, H)           # (1, H) for the VPU reduction
    b1_row = b1.reshape(1, H)
    b2_s = b2.reshape(1)                # SMEM scalar, 1-D to avoid (8,128) padding

    # Batch tile: multiple of 8 sublanes, capped so activations + resident weights
    # stay well inside the scoped VMEM limit on all of v5e/v6e/v7x.
    TB = min(_round_up(block_batch, 8), _round_up(B, 8))
    grid = (pl.cdiv(B, TB),)

    flops = 2 * B * (S + A) * H + 2 * B * H
    bytes_accessed = 4 * (B * (S + A) + (S + A) * H + 2 * H + B + 1)

    return pl.pallas_call(
        _critic_kernel,
        out_shape=jax.ShapeDtypeStruct((B, 1), state.dtype),
        grid=grid,
        in_specs=[
            pl.BlockSpec((TB, S), lambda i: (i, 0)),      # state tile (pipelined)
            pl.BlockSpec((TB, A), lambda i: (i, 0)),      # action tile (pipelined)
            pl.BlockSpec((S, H), lambda i: (0, 0)),       # W1[:S]  (VMEM resident)
            pl.BlockSpec((A, H), lambda i: (0, 0)),       # W1[S:]  (VMEM resident)
            pl.BlockSpec((1, H), lambda i: (0, 0)),       # b1      (VMEM resident)
            pl.BlockSpec((1, H), lambda i: (0, 0)),       # w2 row  (VMEM resident)
            pl.BlockSpec(memory_space=pltpu.MemorySpace.SMEM),  # b2 scalar
        ],
        out_specs=pl.BlockSpec((TB, 1), lambda i: (i, 0)),
        compiler_params=pltpu.CompilerParams(
            dimension_semantics=("parallel",),
        ),
        cost_estimate=pl.CostEstimate(
            flops=flops, transcendentals=0, bytes_accessed=bytes_accessed),
    )(state, action, w1_s, w1_a, b1_row, w2_row, b2_s)


def init_params(key, state_dim, action_dim, hidden_dim):
    """Deterministic synthetic init matching MLPCritic.__init__ shapes.

    PyTorch: fc1.weight ~ N(0, 0.1), fc2.weight ~ N(0, 0.1); biases use the default
    Linear uniform init. Weights are stored transposed (in_features, out_features).
    """
    k1, k2, k3, k4 = jax.random.split(key, 4)
    in_dim = state_dim + action_dim
    w1 = 0.1 * jax.random.normal(k1, (in_dim, hidden_dim), dtype=jnp.float32)
    w2 = 0.1 * jax.random.normal(k2, (hidden_dim, 1), dtype=jnp.float32)
    bound1 = 1.0 / jnp.sqrt(in_dim)
    bound2 = 1.0 / jnp.sqrt(hidden_dim)
    b1 = jax.random.uniform(k3, (1, hidden_dim), dtype=jnp.float32,
                            minval=-bound1, maxval=bound1)
    b2 = jax.random.uniform(k4, (1,), dtype=jnp.float32,
                            minval=-bound2, maxval=bound2)
    return w1, b1, w2, b2


def _reference(state, action, w1, b1, w2, b2):
    x = jnp.concatenate([state, action], axis=-1)
    return jnp.maximum(x @ w1 + b1, 0.0) @ w2 + b2.reshape(1, 1)


if __name__ == "__main__":
    state_dim, action_dim, hidden_dim = 12, 4, 32
    batch = 8

    key = jax.random.PRNGKey(0)
    kp, ks, ka = jax.random.split(key, 3)

    w1, b1, w2, b2 = init_params(kp, state_dim, action_dim, hidden_dim)
    state = jax.random.normal(ks, (batch, state_dim), dtype=jnp.float32)
    action = jax.random.normal(ka, (batch, action_dim), dtype=jnp.float32)

    # Single-tile case.
    q = mlp_critic_forward(state, action, w1, b1, w2, b2)
    jax.block_until_ready(q)
    q_ref = _reference(state, action, w1, b1, w2, b2)
    assert q.shape == (batch, 1)
    assert jnp.allclose(q, q_ref, atol=1e-4, rtol=1e-4)

    # Multi-tile case (exercises the batch grid + partial last tile).
    batch2 = 300
    ks2, ka2 = jax.random.split(jax.random.PRNGKey(1), 2)
    state2 = jax.random.normal(ks2, (batch2, state_dim), dtype=jnp.float32)
    action2 = jax.random.normal(ka2, (batch2, action_dim), dtype=jnp.float32)
    q2 = mlp_critic_forward(state2, action2, w1, b1, w2, b2, block_batch=128)
    jax.block_until_ready(q2)
    q2_ref = _reference(state2, action2, w1, b1, w2, b2)
    assert q2.shape == (batch2, 1)
    assert jnp.allclose(q2, q2_ref, atol=1e-4, rtol=1e-4)

    print("KERNEL_OK")
</pallas_src>

<mosaic_0001>
module attributes {stable_mosaic.version = 11 : i64} {
  func.func @_critic_kernel(%arg0: i32, %arg1: memref<8x12xf32, #tpu.memory_space<vmem>>, %arg2: memref<8x4xf32, #tpu.memory_space<vmem>>, %arg3: memref<12x32xf32, #tpu.memory_space<vmem>>, %arg4: memref<4x32xf32, #tpu.memory_space<vmem>>, %arg5: memref<1x32xf32, #tpu.memory_space<vmem>>, %arg6: memref<1x32xf32, #tpu.memory_space<vmem>>, %arg7: memref<1xf32, #tpu.memory_space<smem>>, %arg8: memref<8x1xf32, #tpu.memory_space<vmem>>) attributes {dimension_semantics = [#tpu.dimension_semantics<parallel>], iteration_bounds = array<i64: 1>, scalar_prefetch = 0 : i64, scratch_operands = 0 : i64, tpu.core_type = #tpu.core_type<tc>, window_params = [{transform_indices = @transform_0, window_bounds = array<i64: 8, 12>}, {transform_indices = @transform_1, window_bounds = array<i64: 8, 4>}, {pipeline_mode = #tpu.pipeline_mode<synchronous>, transform_indices = @transform_2, window_bounds = array<i64: 12, 32>}, {pipeline_mode = #tpu.pipeline_mode<synchronous>, transform_indices = @transform_3, window_bounds = array<i64: 4, 32>}, {pipeline_mode = #tpu.pipeline_mode<synchronous>, transform_indices = @transform_4, window_bounds = array<i64: 1, 32>}, {pipeline_mode = #tpu.pipeline_mode<synchronous>, transform_indices = @transform_5, window_bounds = array<i64: 1, 32>}, {transform_indices = @transform_6, window_bounds = array<i64: 1>}, {transform_indices = @transform_7, window_bounds = array<i64: 8, 1>}]} {
    %c0 = arith.constant 0 : index
    %c0_0 = arith.constant 0 : index
    %0 = vector.load %arg1[%c0, %c0_0] : memref<8x12xf32, #tpu.memory_space<vmem>>, vector<8x12xf32>
    %c0_1 = arith.constant 0 : index
    %c0_2 = arith.constant 0 : index
    %1 = vector.load %arg3[%c0_1, %c0_2] : memref<12x32xf32, #tpu.memory_space<vmem>>, vector<12x32xf32>
    %cst = arith.constant dense<0.000000e+00> : vector<8x32xf32>
    %2 = tpu.matmul %0, %1, %cst {dimension_numbers = #tpu.dot_dimension_numbers<[1], [0], [0], [1], [0, 0, 1, 1], [], []>} : vector<8x12xf32>, vector<12x32xf32>, vector<8x32xf32> -> vector<8x32xf32>
    %c0_3 = arith.constant 0 : index
    %c0_4 = arith.constant 0 : index
    %3 = vector.load %arg2[%c0_3, %c0_4] : memref<8x4xf32, #tpu.memory_space<vmem>>, vector<8x4xf32>
    %c0_5 = arith.constant 0 : index
    %c0_6 = arith.constant 0 : index
    %4 = vector.load %arg4[%c0_5, %c0_6] : memref<4x32xf32, #tpu.memory_space<vmem>>, vector<4x32xf32>
    %cst_7 = arith.constant dense<0.000000e+00> : vector<8x32xf32>
    %5 = tpu.matmul %3, %4, %cst_7 {dimension_numbers = #tpu.dot_dimension_numbers<[1], [0], [0], [1], [0, 0, 1, 1], [], []>} : vector<8x4xf32>, vector<4x32xf32>, vector<8x32xf32> -> vector<8x32xf32>
    %6 = arith.addf %2, %5 : vector<8x32xf32>
    %c0_8 = arith.constant 0 : index
    %c0_9 = arith.constant 0 : index
    %7 = vector.load %arg5[%c0_8, %c0_9] : memref<1x32xf32, #tpu.memory_space<vmem>>, vector<1x32xf32>
    %8 = vector.broadcast %7 : vector<1x32xf32> to vector<8x32xf32>
    %9 = arith.addf %6, %8 : vector<8x32xf32>
    %cst_10 = arith.constant 0.000000e+00 : f32
    %10 = vector.broadcast %cst_10 : f32 to vector<8x32xf32>
    %11 = arith.maximumf %9, %10 : vector<8x32xf32>
    %c0_11 = arith.constant 0 : index
    %c0_12 = arith.constant 0 : index
    %12 = vector.load %arg6[%c0_11, %c0_12] : memref<1x32xf32, #tpu.memory_space<vmem>>, vector<1x32xf32>
    %13 = vector.broadcast %12 : vector<1x32xf32> to vector<8x32xf32>
    %14 = arith.mulf %11, %13 : vector<8x32xf32>
    %cst_13 = arith.constant dense<0.000000e+00> : vector<8xf32>
    %15 = vector.multi_reduction <add>, %14, %cst_13 [1] : vector<8x32xf32> to vector<8xf32>
    %16 = vector.shape_cast %15 : vector<8xf32> to vector<8x1xf32>
    %c0_14 = arith.constant 0 : index
    %17 = memref.load %arg7[%c0_14] : memref<1xf32, #tpu.memory_space<smem>>
    %18 = vector.broadcast %17 : f32 to vector<8x1xf32>
    %19 = arith.addf %16, %18 : vector<8x1xf32>
    %c0_15 = arith.constant 0 : index
    %c0_16 = arith.constant 0 : index
    %20 = vector.load %arg8[%c0_15, %c0_16] : memref<8x1xf32, #tpu.memory_space<vmem>>, vector<8x1xf32>
    tpu.vector_store %arg8[%c0_15, %c0_16], %19 {strides = array<i32>} : memref<8x1xf32, #tpu.memory_space<vmem>>, vector<8x1xf32>,
    return
  }
  func.func @transform_0(%arg0: i32) -> (i32, i32) {
    %c0_i32 = arith.constant 0 : i32
    %c0_i32_0 = arith.constant 0 : i32
    return %arg0, %c0_i32 : i32, i32
  }
  func.func @transform_1(%arg0: i32) -> (i32, i32) {
    %c0_i32 = arith.constant 0 : i32
    %c0_i32_0 = arith.constant 0 : i32
    return %arg0, %c0_i32 : i32, i32
  }
  func.func @transform_2(%arg0: i32) -> (i32, i32) {
    %c0_i32 = arith.constant 0 : i32
    %c0_i32_0 = arith.constant 0 : i32
    %c0_i32_1 = arith.constant 0 : i32
    return %c0_i32, %c0_i32_0 : i32, i32
  }
  func.func @transform_3(%arg0: i32) -> (i32, i32) {
    %c0_i32 = arith.constant 0 : i32
    %c0_i32_0 = arith.constant 0 : i32
    %c0_i32_1 = arith.constant 0 : i32
    return %c0_i32, %c0_i32_0 : i32, i32
  }
  func.func @transform_4(%arg0: i32) -> (i32, i32) {
    %c0_i32 = arith.constant 0 : i32
    %c0_i32_0 = arith.constant 0 : i32
    %c0_i32_1 = arith.constant 0 : i32
    return %c0_i32, %c0_i32_0 : i32, i32
  }
  func.func @transform_5(%arg0: i32) -> (i32, i32) {
    %c0_i32 = arith.constant 0 : i32
    %c0_i32_0 = arith.constant 0 : i32
    %c0_i32_1 = arith.constant 0 : i32
    return %c0_i32, %c0_i32_0 : i32, i32
  }
  func.func @transform_6(%arg0: i32) -> i32 {
    %c0_i32 = arith.constant 0 : i32
    %c0_i32_0 = arith.constant 0 : i32
    return %c0_i32 : i32
  }
  func.func @transform_7(%arg0: i32) -> (i32, i32) {
    %c0_i32 = arith.constant 0 : i32
    %c0_i32_0 = arith.constant 0 : i32
    return %arg0, %c0_i32 : i32, i32
  }
}

</mosaic_0001>

<llo_original>
// kernel: tpu_custom_call.1
$region0: #{tpu_custom_call.1}
  #allocation0 [shape = 'u32[]', space=smem, size = 0x4, offset = 0x4, fixed_abs, tag = 'smem constant byte address 0x4 - core index']
  #allocation1 [shape = 'u32[144,128]{1,0:T(1,128)}', space=vmem, size = 0x12000, scoped, tag = 'internal scratch']
  #allocation2 [shape = 'f32[1]{0:T(128)S(6)}', space=smem, size = 0x200, scoped, tag = 'scoped memory for tpu_custom_call.1']
  %s0 = inlined_call_operand.hbm [shape: f32[8,12], index: 0, kind: input, shape index: {}]
  %s1 = inlined_call_operand.vmem [shape: f32[8,4], index: 1, kind: input, shape index: {}]
  %s2 = inlined_call_operand.vmem [shape: f32[12,32], index: 2, kind: input, shape index: {}]
  %s3 = inlined_call_operand.hbm [shape: f32[4,32], index: 3, kind: input, shape index: {}]
  %s4 = inlined_call_operand.vmem [shape: f32[1,32], index: 4, kind: input, shape index: {}]
  %s5 = inlined_call_operand.vmem [shape: f32[1,32], index: 5, kind: input, shape index: {}]
  %s6 = inlined_call_operand.<no memory space> [shape: f32[1], index: 6, kind: input, shape index: {}]
  %s7 = inlined_call_operand.vmem [shape: f32[8,1], index: 7, kind: output, shape index: {}]
  %s8 = sld [smem:[#allocation0]]
  $region46: #{tpu_custom_call.1} parent=0
    _
  %s10 = ssub.s32 1, %s8
  %s11 = scalar_select 0, %s10, %s8
  %12 = sst [smem:[#allocation2]] %s6
  $region1: #{tpu_custom_call.1} parent=0
    #allocation3 [shape = 'u8[4096]{0}', space=vmem, size = 0x1000, scoped, tag = 'input window, operand 0, single buffered']
    #allocation4 [shape = 's32[1]{0}', space=sflag, size = 0x4, scoped, tag = 'scoped memory for tpu_custom_call.1']
    #allocation5 [shape = 'u8[2048]{0}', space=vmem, size = 0x800, scoped, tag = 'input window, operand 3, single buffered']
    #allocation6 [shape = 's32[1]{0}', space=sflag, size = 0x4, scoped, tag = 'scoped memory for tpu_custom_call.1']
    %13 = vsyncpa [#allocation4], 0
    %14 = vsyncpa [#allocation6], 0
    // Predicated region
    $region2: #{tpu_custom_call.1} parent=1 // pred_check
      _
    $region3: #{tpu_custom_call.1} parent=1 // pred_check_branch
      %16 = sbr.rel (0) target = $region5
    $region4: #{tpu_custom_call.1} parent=1 // pred_region
      %s18 = ssub.s32 128, 128
      %19 = vsyncadd [#allocation4], %s18
      %s21 = sshll.u32 [#allocation3], 4
      %s22 = int_to_ptr.vmem [resolvable:$true] %s21
      %24 = dma.hbm_to_vmem [thread:$0]  %s0, 128, %s22, [#allocation4]
    $region5: #{tpu_custom_call.1} parent=1 // pred_fallthru
      _
    // Predicated region
    $region6: #{tpu_custom_call.1} parent=1 // pred_check
      _
    $region7: #{tpu_custom_call.1} parent=1 // pred_check_branch
      %26 = sbr.rel (0) target = $region9
    $region8: #{tpu_custom_call.1} parent=1 // pred_region
      _
    $region9: #{tpu_custom_call.1} parent=1 // pred_fallthru
      _
    // Predicated region
    $region10: #{tpu_custom_call.1} parent=1 // pred_check
      _
    $region11: #{tpu_custom_call.1} parent=1 // pred_check_branch
      %28 = sbr.rel (0) target = $region13
    $region12: #{tpu_custom_call.1} parent=1 // pred_region
      _
    $region13: #{tpu_custom_call.1} parent=1 // pred_fallthru
      _
    // Predicated region
    $region14: #{tpu_custom_call.1} parent=1 // pred_check
      _
    $region15: #{tpu_custom_call.1} parent=1 // pred_check_branch
      %30 = sbr.rel (0) target = $region17
    $region16: #{tpu_custom_call.1} parent=1 // pred_region
      %s32 = ssub.s32 64, 64
      %33 = vsyncadd [#allocation6], %s32
      %s35 = sshll.u32 [#allocation5], 4
      %s36 = int_to_ptr.vmem [resolvable:$true] %s35
      %38 = dma.hbm_to_vmem [thread:$0]  %s3, 64, %s36, [#allocation6]
    $region17: #{tpu_custom_call.1} parent=1 // pred_fallthru
      _
    // Predicated region
    $region18: #{tpu_custom_call.1} parent=1 // pred_check
      _
    $region19: #{tpu_custom_call.1} parent=1 // pred_check_branch
      %40 = sbr.rel (0) target = $region21
    $region20: #{tpu_custom_call.1} parent=1 // pred_region
      _
    $region21: #{tpu_custom_call.1} parent=1 // pred_fallthru
      _
    // Predicated region
    $region22: #{tpu_custom_call.1} parent=1 // pred_check
      _
    $region23: #{tpu_custom_call.1} parent=1 // pred_check_branch
      %42 = sbr.rel (0) target = $region25
    $region24: #{tpu_custom_call.1} parent=1 // pred_region
      _
    $region25: #{tpu_custom_call.1} parent=1 // pred_fallthru
      _
    // Predicated region
    $region26: #{tpu_custom_call.1} parent=1 // pred_check
      _
    $region27: #{tpu_custom_call.1} parent=1 // pred_check_branch
      %44 = sbr.rel (0) target = $region29
    $region28: #{tpu_custom_call.1} parent=1 // pred_region
      _
    $region29: #{tpu_custom_call.1} parent=1 // pred_fallthru
      _
    // Predicated region
    $region30: #{tpu_custom_call.1} parent=1 // pred_check
      _
    $region31: #{tpu_custom_call.1} parent=1 // pred_check_branch
      %46 = sbr.rel (0) target = $region33
    $region32: #{tpu_custom_call.1} parent=1 // pred_region
      %47 = dma.done [#allocation4], 128
    $region33: #{tpu_custom_call.1} parent=1 // pred_fallthru
      _
    // Predicated region
    $region34: #{tpu_custom_call.1} parent=1 // pred_check
      _
    $region35: #{tpu_custom_call.1} parent=1 // pred_check_branch
      %49 = sbr.rel (0) target = $region37
    $region36: #{tpu_custom_call.1} parent=1 // pred_region
      %50 = dma.done [#allocation6], 64
    $region37: #{tpu_custom_call.1} parent=1 // pred_fallthru
      _
    %v51 = vld [vmem:[#allocation3] sm:$0xff]
    %v52 = vld [vmem:[%s2] sm:$0xff]
    %v53 = vld [vmem:[%s2 + $0x8] sm:$0xf]
    %v54 = vld [vmem:[%s1] sm:$0xff]
    %v55 = vld [vmem:[#allocation5] sm:$0xf]
    %vm56 = vcmask 31744
    %v58 = vsel %vm56, %v54, 0
    %vm60 = vcmask 1043456
    %v62 = vsel %vm60, %v55, 0
    %64 = vmatprep.subr.mxu0 0.0
    %65 = vmatpush1.msra.mxu0 0.0
    %66 = vmatprep.subr.mxu0 0.0
    %67 = vmatpush1.msra.mxu0 0.0
    %68 = vmatprep.subr.mxu0 0.0
    %69 = vmatpush1.msra.mxu0 0.0
    %70 = vmatprep.subr.mxu0 0.0
    %71 = vmatpush1.msra.mxu0 0.0
    %72 = vmatprep.subr.mxu0 0.0
    %73 = vmatpush1.msra.mxu0 0.0
    %74 = vmatprep.subr.mxu0 0.0
    %75 = vmatpush1.msra.mxu0 0.0
    %76 = vmatprep.subr.mxu0 0.0
    %77 = vmatpush1.msra.mxu0 0.0
    %78 = vmatprep.subr.mxu0 0.0
    %79 = vmatpush1.msra.mxu0 0.0
    %80 = vmatprep.subr.mxu0 0.0
    %81 = vmatpush1.msra.mxu0 0.0
    %82 = vmatprep.subr.mxu0 0.0
    %83 = vmatpush1.msra.mxu0 0.0
    %84 = vmatprep.subr.mxu0 0.0
    %85 = vmatpush1.msra.mxu0 0.0
    %86 = vmatprep.subr.mxu0 0.0
    %87 = vmatpush1.msra.mxu0 0.0
    %88 = vmatprep.subr.mxu0 0.0
    %89 = vmatpush1.msra.mxu0 0.0
    %90 = vmatprep.subr.mxu0 0.0
    %91 = vmatpush1.msra.mxu0 0.0
    %92 = vmatprep.subr.mxu0 0.0
    %93 = vmatpush1.msra.mxu0 0.0
    %94 = vmatprep.subr.mxu0 0.0
    %95 = vmatpush1.msra.mxu0 %v62
    %96 = vmatprep.subr.mxu0 0.0
    %97 = vmatpush2.msra.mxu0 0.0
    %98 = vmatprep.subr.mxu0 0.0
    %99 = vmatpush2.msra.mxu0 0.0
    %100 = vmatprep.subr.mxu0 0.0
    %101 = vmatpush2.msra.mxu0 0.0
    %102 = vmatprep.subr.mxu0 0.0
    %103 = vmatpush2.msra.mxu0 0.0
    %104 = vmatprep.subr.mxu0 0.0
    %105 = vmatpush2.msra.mxu0 0.0
    %106 = vmatprep.subr.mxu0 0.0
    %107 = vmatpush2.msra.mxu0 0.0
    %108 = vmatprep.subr.mxu0 0.0
    %109 = vmatpush2.msra.mxu0 0.0
    %110 = vmatprep.subr.mxu0 0.0
    %111 = vmatpush2.msra.mxu0 0.0
    %112 = vmatprep.subr.mxu0 0.0
    %113 = vmatpush2.msra.mxu0 0.0
    %114 = vmatprep.subr.mxu0 0.0
    %115 = vmatpush2.msra.mxu0 0.0
    %116 = vmatprep.subr.mxu0 0.0
    %117 = vmatpush2.msra.mxu0 0.0
    %118 = vmatprep.subr.mxu0 0.0
    %119 = vmatpush2.msra.mxu0 0.0
    %120 = vmatprep.subr.mxu0 0.0
    %121 = vmatpush2.msra.mxu0 0.0
    %122 = vmatprep.subr.mxu0 0.0
    %123 = vmatpush2.msra.mxu0 0.0
    %124 = vmatprep.subr.mxu0 0.0
    %125 = vmatpush2.msra.mxu0 0.0
    %126 = vmatprep.subr.mxu0 0.0
    %127 = vmatpush2.msra.mxu0 0.0
    %128 = vmatprep.mubr.f32.mxu0 0.0
    %129 = vmatmul.mubr.f32.gmra.mxu0 %v58
    %v130 = vpop.f32.mrf.mxu0
    %v131 = vadd.f32 0.0, %v130
    %v132 = vpop.f32.mrf.mxu0
    %133 = vdwg.mxu0
    %vm134 = vcmask 97280
    %v136 = vsel %vm134, %v51, 0
    %v139 = vsel %vm60, %v53, 0
    %141 = vmatprep.subr.mxu0 0.0
    %142 = vmatpush1.msra.mxu0 0.0
    %143 = vmatprep.subr.mxu0 0.0
    %144 = vmatpush1.msra.mxu0 0.0
    %145 = vmatprep.subr.mxu0 0.0
    %146 = vmatpush1.msra.mxu0 0.0
    %147 = vmatprep.subr.mxu0 0.0
    %148 = vmatpush1.msra.mxu0 0.0
    %149 = vmatprep.subr.mxu0 0.0
    %150 = vmatpush1.msra.mxu0 0.0
    %151 = vmatprep.subr.mxu0 0.0
    %152 = vmatpush1.msra.mxu0 0.0
    %153 = vmatprep.subr.mxu0 0.0
    %154 = vmatpush1.msra.mxu0 0.0
    %155 = vmatprep.subr.mxu0 0.0
    %156 = vmatpush1.msra.mxu0 0.0
    %157 = vmatprep.subr.mxu0 0.0
    %158 = vmatpush1.msra.mxu0 0.0
    %159 = vmatprep.subr.mxu0 0.0
    %160 = vmatpush1.msra.mxu0 0.0
    %161 = vmatprep.subr.mxu0 0.0
    %162 = vmatpush1.msra.mxu0 0.0
    %163 = vmatprep.subr.mxu0 0.0
    %164 = vmatpush1.msra.mxu0 0.0
    %165 = vmatprep.subr.mxu0 0.0
    %166 = vmatpush1.msra.mxu0 0.0
    %167 = vmatprep.subr.mxu0 0.0
    %168 = vmatpush1.msra.mxu0 0.0
    %169 = vmatprep.subr.mxu0 0.0
    %170 = vmatpush1.msra.mxu0 %v139
    %171 = vmatprep.subr.mxu0 0.0
    %172 = vmatpush1.msra.mxu0 %v52
    %173 = vmatprep.subr.mxu0 0.0
    %174 = vmatpush2.msra.mxu0 0.0
    %175 = vmatprep.subr.mxu0 0.0
    %176 = vmatpush2.msra.mxu0 0.0
    %177 = vmatprep.subr.mxu0 0.0
    %178 = vmatpush2.msra.mxu0 0.0
    %179 = vmatprep.subr.mxu0 0.0
    %180 = vmatpush2.msra.mxu0 0.0
    %181 = vmatprep.subr.mxu0 0.0
    %182 = vmatpush2.msra.mxu0 0.0
    %183 = vmatprep.subr.mxu0 0.0
    %184 = vmatpush2.msra.mxu0 0.0
    %185 = vmatprep.subr.mxu0 0.0
    %186 = vmatpush2.msra.mxu0 0.0
    %187 = vmatprep.subr.mxu0 0.0
    %188 = vmatpush2.msra.mxu0 0.0
    %189 = vmatprep.subr.mxu0 0.0
    %190 = vmatpush2.msra.mxu0 0.0
    %191 = vmatprep.subr.mxu0 0.0
    %192 = vmatpush2.msra.mxu0 0.0
    %193 = vmatprep.subr.mxu0 0.0
    %194 = vmatpush2.msra.mxu0 0.0
    %195 = vmatprep.subr.mxu0 0.0
    %196 = vmatpush2.msra.mxu0 0.0
    %197 = vmatprep.subr.mxu0 0.0
    %198 = vmatpush2.msra.mxu0 0.0
    %199 = vmatprep.subr.mxu0 0.0
    %200 = vmatpush2.msra.mxu0 0.0
    %201 = vmatprep.subr.mxu0 0.0
    %202 = vmatpush2.msra.mxu0 0.0
    %203 = vmatprep.subr.mxu0 0.0
    %204 = vmatpush2.msra.mxu0 0.0
    %205 = vmatprep.mubr.f32.mxu0 0.0
    %206 = vmatmul.mubr.f32.gmra.mxu0 %v136
    %v207 = vpop.f32.mrf.mxu0
    %v208 = vadd.f32 %v131, %v207
    %v209 = vpop.f32.mrf.mxu0
    %210 = vdwg.mxu0
    %v211 = vld [vmem:[%s4] sm:$0x1]
    %v213 = vlaneseq
    %v214 = vshrl.u32 %v213, 7
    %v215 = vsub.s32 0, %v214
    %v216 = vrot.slane %v211, %v215
    %v218 = vadd.f32 %v208, %v216
    %v219 = vmax.f32 %v218, 0.0
    %v220 = vld [vmem:[%s5] sm:$0x1]
    %v222 = vlaneseq
    %v223 = vshrl.u32 %v222, 7
    %v224 = vsub.s32 0, %v223
    %v225 = vrot.slane %v220, %v224
    %v227 = vmul.f32 %v219, %v225
    %vm228 = vcmask 261120
    %v229 = vsel %vm228, %v227, 0.0
    %230 = vadd.xlane.f32.xlu0 %v229
    %v231 = vpop.xlane.xlu0 %230
    %s232 = sld [smem:[#allocation2]]
    %v233 = vstv %s232
    %v234 = vadd.f32 %v231, %v233
    %vm235 = vcmask 7168
    %236 = vst.msk [vmem:[%s7] sm:$0xff] %vm235, %v234
    // Predicated region
    $region38: #{tpu_custom_call.1} parent=1 // pred_check
      _
    $region39: #{tpu_custom_call.1} parent=1 // pred_check_branch
      %238 = sbr.rel (0) target = $region41
    $region40: #{tpu_custom_call.1} parent=1 // pred_region
      _
    $region41: #{tpu_custom_call.1} parent=1 // pred_fallthru
      _
    // Predicated region
    $region42: #{tpu_custom_call.1} parent=1 // pred_check
      _
    $region43: #{tpu_custom_call.1} parent=1 // pred_check_branch
      %240 = sbr.rel (0) target = $region45
    $region44: #{tpu_custom_call.1} parent=1 // pred_region
      _
    $region45: #{tpu_custom_call.1} parent=1 // pred_fallthru
      _
    %241 = vsyncpa [#allocation4], 1
    %242 = vsyncpa [#allocation6], 1

</llo_original>
